<compile_context>
chip_gen: v7x
topology: tpu7x:2x2x1
jax: 0.10.0
libtpu: 0.0.40
codegen_flags: <defaults>
</compile_context>

<pallas_src>
import jax
import jax.numpy as jnp
from jax.experimental import pallas as pl
from jax.experimental.pallas import tpu as pltpu


def _round_up(n, m):
    return ((n + m - 1) // m) * m


# ----------------------------------------------------------------------------- kernels
def _encoder_single_kernel(x_ref, w1_ref, b1_ref, w2_ref, b2_ref,
                           w3_ref, b3_ref, w4_ref, b4_ref, out_ref):
    """Grid = (batch tiles,).  w1 fully resident; no accumulator needed."""
    bf16 = jnp.bfloat16
    # fc1: cast f32 -> bf16 in-register (VPU work hidden under DMA), f32 accumulate.
    h = jnp.dot(x_ref[...].astype(bf16), w1_ref[...].astype(bf16),
                preferred_element_type=jnp.float32)
    h = jnp.maximum(h + b1_ref[...], 0.0)
    h = jnp.dot(h.astype(bf16), w2_ref[...].astype(bf16),
                preferred_element_type=jnp.float32) + b2_ref[...]
    h = jnp.maximum(h, 0.0)
    h = jnp.dot(h.astype(bf16), w3_ref[...].astype(bf16),
                preferred_element_type=jnp.float32) + b3_ref[...]
    h = jnp.maximum(h, 0.0)
    h = jnp.dot(h.astype(bf16), w4_ref[...].astype(bf16),
                preferred_element_type=jnp.float32) + b4_ref[...]
    out_ref[...] = h.astype(out_ref.dtype)


def _make_ktiled_kernel(d_in, tile_k, needs_mask):
    """Grid = (batch tiles, K tiles), nk >= 2.  fc1 K-tiled with f32 accumulator."""
    bf16 = jnp.bfloat16

    def kernel(x_ref, w1_ref, b1_ref, w2_ref, b2_ref, w3_ref, b3_ref,
               w4_ref, b4_ref, out_ref, acc_ref):
        k = pl.program_id(1)
        nk = pl.num_programs(1)

        x = x_ref[...]
        w1 = w1_ref[...]
        if needs_mask:
            # Only the last K block has columns/rows past d_in; zero them in BOTH
            # operands so stale VMEM (possibly NaN/Inf) cannot leak into the dot.
            valid = d_in - k * tile_k          # >= tile_k for all non-last blocks
            col = jax.lax.broadcasted_iota(jnp.int32, x.shape, 1)
            x = jnp.where(col < valid, x, 0.0)
            row = jax.lax.broadcasted_iota(jnp.int32, w1.shape, 0)
            w1 = jnp.where(row < valid, w1, 0.0)

        partial = jnp.dot(x.astype(bf16), w1.astype(bf16),
                          preferred_element_type=jnp.float32)

        @pl.when(k == 0)
        def _():                               # first step: write, no zero-init store
            acc_ref[...] = partial

        @pl.when(jnp.logical_and(k > 0, k < nk - 1))
        def _():
            acc_ref[...] += partial

        @pl.when(k == nk - 1)
        def _():                               # fold last partial into the finalize
            h = acc_ref[...] + partial
            h = jnp.maximum(h + b1_ref[...], 0.0)
            h = jnp.dot(h.astype(bf16), w2_ref[...].astype(bf16),
                        preferred_element_type=jnp.float32) + b2_ref[...]
            h = jnp.maximum(h, 0.0)
            h = jnp.dot(h.astype(bf16), w3_ref[...].astype(bf16),
                        preferred_element_type=jnp.float32) + b3_ref[...]
            h = jnp.maximum(h, 0.0)
            h = jnp.dot(h.astype(bf16), w4_ref[...].astype(bf16),
                        preferred_element_type=jnp.float32) + b4_ref[...]
            out_ref[...] = h.astype(out_ref.dtype)

    return kernel


# ----------------------------------------------------------------------------- wrapper
def encoder_forward(x, params, *, tile_b=1024, tile_k=2048,
                    vmem_budget_bytes=32 * 1024 * 1024,
                    force_k_tiling=False):
    """x: (..., input_size) float32.  params: w1..w4 (in,out), b1..b4 (out,)."""
    orig_shape = x.shape
    if x.ndim != 2:
        x = x.reshape(-1, orig_shape[-1])
    x = x.astype(jnp.float32)
    B, D_in = x.shape

    w1, b1 = params["w1"], params["b1"]
    w2, b2 = params["w2"], params["b2"]
    w3, b3 = params["w3"], params["b3"]
    w4, b4 = params["w4"], params["b4"]
    H1, H2, H3 = w1.shape[1], w2.shape[1], w3.shape[1]   # 512, 64, 16
    D_out = w4.shape[1]                                  # 8
    f32 = jnp.float32

    w1f, w2f, w3f, w4f = (w.astype(f32) for w in (w1, w2, w3, w4))
    # Biases as (1, N) rows so they broadcast against the (tile_b, N) activations.
    b1r = b1.astype(f32).reshape(1, H1)
    b2r = b2.astype(f32).reshape(1, H2)
    b3r = b3.astype(f32).reshape(1, H3)
    b4r = b4.astype(f32).reshape(1, D_out)

    # --- batch (M) tiling: ceil-divided grid, no padding / copying of x ----------
    tile_b = max(8, (tile_b // 8) * 8)
    B8 = _round_up(B, 8)
    if B8 >= 512:
        # Keep >= 2 batch tiles so the "parallel" axis can shard across both
        # TensorCores on v7x; keep tiles a multiple of 256 (256-wide MXU rows).
        cap = max(256, (B8 // 2) // 256 * 256)
        tile_b_eff = min(tile_b, cap)
    else:
        tile_b_eff = min(tile_b, B8)

    # --- fc1 contraction (K) handling --------------------------------------------
    small_bytes = 2 * 4 * (H1 * H2 + H2 * H3 + H3 * D_out + H1 + H2 + H3 + D_out)

    def _single_bytes(tb):
        return (2 * tb * D_in * 4 + 2 * D_in * H1 * 4
                + 2 * tb * D_out * 4 + small_bytes)

    def _ktiled_bytes(tb, tk):
        return (2 * tb * tk * 4 + 2 * tk * H1 * 4 + tb * H1 * 4
                + 2 * tb * D_out * 4 + small_bytes)

    use_single = (not force_k_tiling) and (_single_bytes(tile_b_eff) <= vmem_budget_bytes)

    tile_k_eff, nk = D_in, 1
    if not use_single:
        tile_k_eff = max(128, (min(tile_k, _round_up(D_in, 128)) // 128) * 128)
        while (_ktiled_bytes(tile_b_eff, tile_k_eff) > vmem_budget_bytes
               and tile_k_eff > 128):
            tile_k_eff = max(128, ((tile_k_eff // 2) // 128) * 128)
        while (_ktiled_bytes(tile_b_eff, tile_k_eff) > vmem_budget_bytes
               and tile_b_eff > 8):
            tile_b_eff = max(8, ((tile_b_eff // 2) // 8) * 8)
        nk = pl.cdiv(D_in, tile_k_eff)
        if nk < 2:
            # A single K block covers D_in anyway -> use the simpler kernel
            # (no accumulator round-trip through VMEM).
            use_single = True
            tile_k_eff, nk = D_in, 1

    nb = pl.cdiv(B, tile_b_eff)

    if use_single:
        footprint = _single_bytes(tile_b_eff)
    else:
        footprint = _ktiled_bytes(tile_b_eff, tile_k_eff)
    # Explicit scoped-VMEM limit with headroom; capped under v7x's 64 MiB physical.
    vmem_limit = int(min(56 * 2 ** 20, max(2 * footprint, 16 * 2 ** 20)))

    # Advisory cost estimate (w1 re-streamed once per batch tile in the K-tiled path).
    w1_reads = 1 if use_single else nb
    flops = 2 * B * (D_in * H1 + H1 * H2 + H2 * H3 + H3 * D_out)
    bytes_accessed = (B * D_in * 4
                      + w1_reads * D_in * H1 * 4
                      + (H1 * H2 + H2 * H3 + H3 * D_out) * 4
                      + (H1 + H2 + H3 + D_out) * 4
                      + B * D_out * 4)
    cost = pl.CostEstimate(flops=flops, transcendentals=0,
                           bytes_accessed=bytes_accessed)

    out_shape = jax.ShapeDtypeStruct((B, D_out), f32)

    if use_single:
        const = lambda i: (0, 0)
        out = pl.pallas_call(
            _encoder_single_kernel,
            out_shape=out_shape,
            grid=(nb,),
            in_specs=[
                pl.BlockSpec((tile_b_eff, D_in), lambda i: (i, 0)),   # x tile (f32)
                pl.BlockSpec((D_in, H1), const),                      # w1 resident
                pl.BlockSpec((1, H1), const),                         # b1
                pl.BlockSpec((H1, H2), const),                        # w2
                pl.BlockSpec((1, H2), const),                         # b2
                pl.BlockSpec((H2, H3), const),                        # w3
                pl.BlockSpec((1, H3), const),                         # b3
                pl.BlockSpec((H3, D_out), const),                     # w4
                pl.BlockSpec((1, D_out), const),                      # b4
            ],
            out_specs=pl.BlockSpec((tile_b_eff, D_out), lambda i: (i, 0)),
            compiler_params=pltpu.CompilerParams(
                dimension_semantics=("parallel",),
                vmem_limit_bytes=vmem_limit),
            cost_estimate=cost,
        )(x, w1f, b1r, w2f, b2r, w3f, b3r, w4f, b4r)
    else:
        const = lambda i, k: (0, 0)
        kernel = _make_ktiled_kernel(D_in, tile_k_eff, D_in % tile_k_eff != 0)
        out = pl.pallas_call(
            kernel,
            out_shape=out_shape,
            grid=(nb, nk),
            in_specs=[
                pl.BlockSpec((tile_b_eff, tile_k_eff), lambda i, k: (i, k)),  # x
                pl.BlockSpec((tile_k_eff, H1), lambda i, k: (k, 0)),          # w1 (K-tiled)
                pl.BlockSpec((1, H1), const),                                 # b1
                pl.BlockSpec((H1, H2), const),                                # w2
                pl.BlockSpec((1, H2), const),                                 # b2
                pl.BlockSpec((H2, H3), const),                                # w3
                pl.BlockSpec((1, H3), const),                                 # b3
                pl.BlockSpec((H3, D_out), const),                             # w4
                pl.BlockSpec((1, D_out), const),                              # b4
            ],
            out_specs=pl.BlockSpec((tile_b_eff, D_out), lambda i, k: (i, 0)),
            scratch_shapes=[pltpu.VMEM((tile_b_eff, H1), jnp.float32)],
            compiler_params=pltpu.CompilerParams(
                dimension_semantics=("parallel", "arbitrary"),
                vmem_limit_bytes=vmem_limit),
            cost_estimate=cost,
        )(x, w1f, b1r, w2f, b2r, w3f, b3r, w4f, b4r)

    if len(orig_shape) != 2:
        out = out.reshape(orig_shape[:-1] + (D_out,))
    return out


# ----------------------------------------------------------------------------- helpers
def init_params(key, input_size):
    """Deterministic init mimicking torch.nn.Linear default (U(-1/sqrt(fan_in), +))."""
    dims = [(input_size, 512), (512, 64), (64, 16), (16, 8)]
    params = {}
    for idx, (fan_in, fan_out) in enumerate(dims, start=1):
        key, kw, kb = jax.random.split(key, 3)
        bound = 1.0 / (fan_in ** 0.5)
        params[f"w{idx}"] = jax.random.uniform(
            kw, (fan_in, fan_out), jnp.float32, -bound, bound)
        params[f"b{idx}"] = jax.random.uniform(
            kb, (fan_out,), jnp.float32, -bound, bound)
    return params


def encoder_ref(x, params):
    h = jnp.maximum(x @ params["w1"] + params["b1"], 0.0)
    h = jnp.maximum(h @ params["w2"] + params["b2"], 0.0)
    h = jnp.maximum(h @ params["w3"] + params["b3"], 0.0)
    return h @ params["w4"] + params["b4"]


if __name__ == "__main__":
    root = jax.random.PRNGKey(0)
    k1x, k1p, k2x, k2p = jax.random.split(root, 4)

    # Test 1: small input_size -> resident-w1 fast path; B not a multiple of 8
    # exercises the ceil-divided batch grid (no padding copies of x).
    B, input_size = 20, 32
    x = jax.random.normal(k1x, (B, input_size), jnp.float32)
    params = init_params(k1p, input_size)
    out = jax.block_until_ready(encoder_forward(x, params))
    ref = encoder_ref(x, params)
    assert out.shape == (B, 8), out.shape
    # bf16 MXU inputs with f32 accumulation vs f32 reference.
    assert jnp.allclose(out, ref, atol=3e-2, rtol=3e-2), \
        float(jnp.max(jnp.abs(out - ref)))

    # Test 2: force the K-tiled fc1 path, with D_in % tile_k != 0 so the in-kernel
    # tail masking (x columns + w1 rows) is exercised.
    B2, input_size2 = 16, 300
    x2 = jax.random.normal(k2x, (B2, input_size2), jnp.float32)
    params2 = init_params(k2p, input_size2)
    out2 = jax.block_until_ready(
        encoder_forward(x2, params2, tile_k=128, force_k_tiling=True))
    ref2 = encoder_ref(x2, params2)
    assert out2.shape == (B2, 8), out2.shape
    assert jnp.allclose(out2, ref2, atol=3e-2, rtol=3e-2), \
        float(jnp.max(jnp.abs(out2 - ref2)))

    print("KERNEL_OK")
</pallas_src>

<mosaic_0001>
module attributes {stable_mosaic.version = 11 : i64} {
  func.func @_encoder_single_kernel(%arg0: i32, %arg1: memref<24x32xf32, #tpu.memory_space<vmem>>, %arg2: memref<32x512xf32, #tpu.memory_space<vmem>>, %arg3: memref<1x512xf32, #tpu.memory_space<vmem>>, %arg4: memref<512x64xf32, #tpu.memory_space<vmem>>, %arg5: memref<1x64xf32, #tpu.memory_space<vmem>>, %arg6: memref<64x16xf32, #tpu.memory_space<vmem>>, %arg7: memref<1x16xf32, #tpu.memory_space<vmem>>, %arg8: memref<16x8xf32, #tpu.memory_space<vmem>>, %arg9: memref<1x8xf32, #tpu.memory_space<vmem>>, %arg10: memref<24x8xf32, #tpu.memory_space<vmem>>) attributes {dimension_semantics = [#tpu.dimension_semantics<parallel>], iteration_bounds = array<i64: 1>, scalar_prefetch = 0 : i64, scratch_operands = 0 : i64, tpu.core_type = #tpu.core_type<tc>, window_params = [{transform_indices = @transform_0, window_bounds = array<i64: 24, 32>}, {pipeline_mode = #tpu.pipeline_mode<synchronous>, transform_indices = @transform_1, window_bounds = array<i64: 32, 512>}, {pipeline_mode = #tpu.pipeline_mode<synchronous>, transform_indices = @transform_2, window_bounds = array<i64: 1, 512>}, {pipeline_mode = #tpu.pipeline_mode<synchronous>, transform_indices = @transform_3, window_bounds = array<i64: 512, 64>}, {pipeline_mode = #tpu.pipeline_mode<synchronous>, transform_indices = @transform_4, window_bounds = array<i64: 1, 64>}, {pipeline_mode = #tpu.pipeline_mode<synchronous>, transform_indices = @transform_5, window_bounds = array<i64: 64, 16>}, {pipeline_mode = #tpu.pipeline_mode<synchronous>, transform_indices = @transform_6, window_bounds = array<i64: 1, 16>}, {pipeline_mode = #tpu.pipeline_mode<synchronous>, transform_indices = @transform_7, window_bounds = array<i64: 16, 8>}, {pipeline_mode = #tpu.pipeline_mode<synchronous>, transform_indices = @transform_8, window_bounds = array<i64: 1, 8>}, {transform_indices = @transform_9, window_bounds = array<i64: 24, 8>}]} {
    %c0 = arith.constant 0 : index
    %c0_0 = arith.constant 0 : index
    %0 = vector.load %arg1[%c0, %c0_0] : memref<24x32xf32, #tpu.memory_space<vmem>>, vector<24x32xf32>
    %1 = arith.truncf %0 : vector<24x32xf32> to vector<24x32xbf16>
    %c0_1 = arith.constant 0 : index
    %c0_2 = arith.constant 0 : index
    %2 = vector.load %arg2[%c0_1, %c0_2] : memref<32x512xf32, #tpu.memory_space<vmem>>, vector<32x512xf32>
    %3 = arith.truncf %2 : vector<32x512xf32> to vector<32x512xbf16>
    %cst = arith.constant dense<0.000000e+00> : vector<24x512xf32>
    %4 = tpu.matmul %1, %3, %cst {dimension_numbers = #tpu.dot_dimension_numbers<[1], [0], [0], [1], [0, 0, 1, 1], [], []>} : vector<24x32xbf16>, vector<32x512xbf16>, vector<24x512xf32> -> vector<24x512xf32>
    %c0_3 = arith.constant 0 : index
    %c0_4 = arith.constant 0 : index
    %5 = vector.load %arg3[%c0_3, %c0_4] : memref<1x512xf32, #tpu.memory_space<vmem>>, vector<1x512xf32>
    %6 = vector.broadcast %5 : vector<1x512xf32> to vector<24x512xf32>
    %7 = arith.addf %4, %6 : vector<24x512xf32>
    %cst_5 = arith.constant 0.000000e+00 : f32
    %8 = vector.broadcast %cst_5 : f32 to vector<24x512xf32>
    %9 = arith.maximumf %7, %8 : vector<24x512xf32>
    %10 = arith.truncf %9 : vector<24x512xf32> to vector<24x512xbf16>
    %c0_6 = arith.constant 0 : index
    %c0_7 = arith.constant 0 : index
    %11 = vector.load %arg4[%c0_6, %c0_7] : memref<512x64xf32, #tpu.memory_space<vmem>>, vector<512x64xf32>
    %12 = arith.truncf %11 : vector<512x64xf32> to vector<512x64xbf16>
    %cst_8 = arith.constant dense<0.000000e+00> : vector<24x64xf32>
    %13 = tpu.matmul %10, %12, %cst_8 {dimension_numbers = #tpu.dot_dimension_numbers<[1], [0], [0], [1], [0, 0, 1, 1], [], []>} : vector<24x512xbf16>, vector<512x64xbf16>, vector<24x64xf32> -> vector<24x64xf32>
    %c0_9 = arith.constant 0 : index
    %c0_10 = arith.constant 0 : index
    %14 = vector.load %arg5[%c0_9, %c0_10] : memref<1x64xf32, #tpu.memory_space<vmem>>, vector<1x64xf32>
    %15 = vector.broadcast %14 : vector<1x64xf32> to vector<24x64xf32>
    %16 = arith.addf %13, %15 : vector<24x64xf32>
    %cst_11 = arith.constant 0.000000e+00 : f32
    %17 = vector.broadcast %cst_11 : f32 to vector<24x64xf32>
    %18 = arith.maximumf %16, %17 : vector<24x64xf32>
    %19 = arith.truncf %18 : vector<24x64xf32> to vector<24x64xbf16>
    %c0_12 = arith.constant 0 : index
    %c0_13 = arith.constant 0 : index
    %20 = vector.load %arg6[%c0_12, %c0_13] : memref<64x16xf32, #tpu.memory_space<vmem>>, vector<64x16xf32>
    %21 = arith.truncf %20 : vector<64x16xf32> to vector<64x16xbf16>
    %cst_14 = arith.constant dense<0.000000e+00> : vector<24x16xf32>
    %22 = tpu.matmul %19, %21, %cst_14 {dimension_numbers = #tpu.dot_dimension_numbers<[1], [0], [0], [1], [0, 0, 1, 1], [], []>} : vector<24x64xbf16>, vector<64x16xbf16>, vector<24x16xf32> -> vector<24x16xf32>
    %c0_15 = arith.constant 0 : index
    %c0_16 = arith.constant 0 : index
    %23 = vector.load %arg7[%c0_15, %c0_16] : memref<1x16xf32, #tpu.memory_space<vmem>>, vector<1x16xf32>
    %24 = vector.broadcast %23 : vector<1x16xf32> to vector<24x16xf32>
    %25 = arith.addf %22, %24 : vector<24x16xf32>
    %cst_17 = arith.constant 0.000000e+00 : f32
    %26 = vector.broadcast %cst_17 : f32 to vector<24x16xf32>
    %27 = arith.maximumf %25, %26 : vector<24x16xf32>
    %28 = arith.truncf %27 : vector<24x16xf32> to vector<24x16xbf16>
    %c0_18 = arith.constant 0 : index
    %c0_19 = arith.constant 0 : index
    %29 = vector.load %arg8[%c0_18, %c0_19] : memref<16x8xf32, #tpu.memory_space<vmem>>, vector<16x8xf32>
    %30 = arith.truncf %29 : vector<16x8xf32> to vector<16x8xbf16>
    %cst_20 = arith.constant dense<0.000000e+00> : vector<24x8xf32>
    %31 = tpu.matmul %28, %30, %cst_20 {dimension_numbers = #tpu.dot_dimension_numbers<[1], [0], [0], [1], [0, 0, 1, 1], [], []>} : vector<24x16xbf16>, vector<16x8xbf16>, vector<24x8xf32> -> vector<24x8xf32>
    %c0_21 = arith.constant 0 : index
    %c0_22 = arith.constant 0 : index
    %32 = vector.load %arg9[%c0_21, %c0_22] : memref<1x8xf32, #tpu.memory_space<vmem>>, vector<1x8xf32>
    %33 = vector.broadcast %32 : vector<1x8xf32> to vector<24x8xf32>
    %34 = arith.addf %31, %33 : vector<24x8xf32>
    %c0_23 = arith.constant 0 : index
    %c0_24 = arith.constant 0 : index
    %35 = vector.load %arg10[%c0_23, %c0_24] : memref<24x8xf32, #tpu.memory_space<vmem>>, vector<24x8xf32>
    tpu.vector_store %arg10[%c0_23, %c0_24], %34 {strides = array<i32>} : memref<24x8xf32, #tpu.memory_space<vmem>>, vector<24x8xf32>,
    return
  }
  func.func @transform_0(%arg0: i32) -> (i32, i32) {
    %c0_i32 = arith.constant 0 : i32
    %c0_i32_0 = arith.constant 0 : i32
    return %arg0, %c0_i32 : i32, i32
  }
  func.func @transform_1(%arg0: i32) -> (i32, i32) {
    %c0_i32 = arith.constant 0 : i32
    %c0_i32_0 = arith.constant 0 : i32
    %c0_i32_1 = arith.constant 0 : i32
    return %c0_i32, %c0_i32_0 : i32, i32
  }
  func.func @transform_2(%arg0: i32) -> (i32, i32) {
    %c0_i32 = arith.constant 0 : i32
    %c0_i32_0 = arith.constant 0 : i32
    %c0_i32_1 = arith.constant 0 : i32
    return %c0_i32, %c0_i32_0 : i32, i32
  }
  func.func @transform_3(%arg0: i32) -> (i32, i32) {
    %c0_i32 = arith.constant 0 : i32
    %c0_i32_0 = arith.constant 0 : i32
    %c0_i32_1 = arith.constant 0 : i32
    return %c0_i32, %c0_i32_0 : i32, i32
  }
  func.func @transform_4(%arg0: i32) -> (i32, i32) {
    %c0_i32 = arith.constant 0 : i32
    %c0_i32_0 = arith.constant 0 : i32
    %c0_i32_1 = arith.constant 0 : i32
    return %c0_i32, %c0_i32_0 : i32, i32
  }
  func.func @transform_5(%arg0: i32) -> (i32, i32) {
    %c0_i32 = arith.constant 0 : i32
    %c0_i32_0 = arith.constant 0 : i32
    %c0_i32_1 = arith.constant 0 : i32
    return %c0_i32, %c0_i32_0 : i32, i32
  }
  func.func @transform_6(%arg0: i32) -> (i32, i32) {
    %c0_i32 = arith.constant 0 : i32
    %c0_i32_0 = arith.constant 0 : i32
    %c0_i32_1 = arith.constant 0 : i32
    return %c0_i32, %c0_i32_0 : i32, i32
  }
  func.func @transform_7(%arg0: i32) -> (i32, i32) {
    %c0_i32 = arith.constant 0 : i32
    %c0_i32_0 = arith.constant 0 : i32
    %c0_i32_1 = arith.constant 0 : i32
    return %c0_i32, %c0_i32_0 : i32, i32
  }
  func.func @transform_8(%arg0: i32) -> (i32, i32) {
    %c0_i32 = arith.constant 0 : i32
    %c0_i32_0 = arith.constant 0 : i32
    %c0_i32_1 = arith.constant 0 : i32
    return %c0_i32, %c0_i32_0 : i32, i32
  }
  func.func @transform_9(%arg0: i32) -> (i32, i32) {
    %c0_i32 = arith.constant 0 : i32
    %c0_i32_0 = arith.constant 0 : i32
    return %arg0, %c0_i32 : i32, i32
  }
}

</mosaic_0001>

<llo_original>
// kernel: tpu_custom_call.1
$region0: #{tpu_custom_call.1}
  #allocation0 [shape = 'u32[]', space=smem, size = 0x4, offset = 0x4, fixed_abs, tag = 'smem constant byte address 0x4 - core index']
  #allocation1 [shape = 'u32[144,128]{1,0:T(1,128)}', space=vmem, size = 0x12000, scoped, tag = 'internal scratch']
  %s0 = inlined_call_operand.vmem [shape: f32[20,32], index: 0, kind: input, shape index: {}]
  %s1 = inlined_call_operand.vmem [shape: f32[32,512], index: 1, kind: input, shape index: {}]
  %s2 = inlined_call_operand.vmem [shape: f32[1,512], index: 2, kind: input, shape index: {}]
  %s3 = inlined_call_operand.vmem [shape: f32[512,64], index: 3, kind: input, shape index: {}]
  %s4 = inlined_call_operand.vmem [shape: f32[1,64], index: 4, kind: input, shape index: {}]
  %s5 = inlined_call_operand.vmem [shape: f32[64,16], index: 5, kind: input, shape index: {}]
  %s6 = inlined_call_operand.vmem [shape: f32[1,16], index: 6, kind: input, shape index: {}]
  %s7 = inlined_call_operand.vmem [shape: f32[16,8], index: 7, kind: input, shape index: {}]
  %s8 = inlined_call_operand.vmem [shape: f32[1,8], index: 8, kind: input, shape index: {}]
  %s9 = inlined_call_operand.vmem [shape: f32[20,8], index: 9, kind: output, shape index: {}]
  %s10 = sld [smem:[#allocation0]]
  $region46: #{tpu_custom_call.1} parent=0
    _
  %s12 = ssub.s32 1, %s10
  %s13 = scalar_select 0, %s12, %s10
  // Predicated region
  $region2: #{tpu_custom_call.1} parent=0 // pred_check
    _
  $region3: #{tpu_custom_call.1} parent=0 // pred_check_branch
    %15 = sbr.rel (0) target = $region5
  $region4: #{tpu_custom_call.1} parent=0 // pred_region
    _
  $region5: #{tpu_custom_call.1} parent=0 // pred_fallthru
    _
  // Predicated region
  $region6: #{tpu_custom_call.1} parent=0 // pred_check
    _
  $region7: #{tpu_custom_call.1} parent=0 // pred_check_branch
    %17 = sbr.rel (0) target = $region9
  $region8: #{tpu_custom_call.1} parent=0 // pred_region
    _
  $region9: #{tpu_custom_call.1} parent=0 // pred_fallthru
    _
  // Predicated region
  $region10: #{tpu_custom_call.1} parent=0 // pred_check
    _
  $region11: #{tpu_custom_call.1} parent=0 // pred_check_branch
    %19 = sbr.rel (0) target = $region13
  $region12: #{tpu_custom_call.1} parent=0 // pred_region
    _
  $region13: #{tpu_custom_call.1} parent=0 // pred_fallthru
    _
  // Predicated region
  $region14: #{tpu_custom_call.1} parent=0 // pred_check
    _
  $region15: #{tpu_custom_call.1} parent=0 // pred_check_branch
    %21 = sbr.rel (0) target = $region17
  $region16: #{tpu_custom_call.1} parent=0 // pred_region
    _
  $region17: #{tpu_custom_call.1} parent=0 // pred_fallthru
    _
  // Predicated region
  $region18: #{tpu_custom_call.1} parent=0 // pred_check
    _
  $region19: #{tpu_custom_call.1} parent=0 // pred_check_branch
    %23 = sbr.rel (0) target = $region21
  $region20: #{tpu_custom_call.1} parent=0 // pred_region
    _
  $region21: #{tpu_custom_call.1} parent=0 // pred_fallthru
    _
  // Predicated region
  $region22: #{tpu_custom_call.1} parent=0 // pred_check
    _
  $region23: #{tpu_custom_call.1} parent=0 // pred_check_branch
    %25 = sbr.rel (0) target = $region25
  $region24: #{tpu_custom_call.1} parent=0 // pred_region
    _
  $region25: #{tpu_custom_call.1} parent=0 // pred_fallthru
    _
  // Predicated region
  $region26: #{tpu_custom_call.1} parent=0 // pred_check
    _
  $region27: #{tpu_custom_call.1} parent=0 // pred_check_branch
    %27 = sbr.rel (0) target = $region29
  $region28: #{tpu_custom_call.1} parent=0 // pred_region
    _
  $region29: #{tpu_custom_call.1} parent=0 // pred_fallthru
    _
  // Predicated region
  $region30: #{tpu_custom_call.1} parent=0 // pred_check
    _
  $region31: #{tpu_custom_call.1} parent=0 // pred_check_branch
    %29 = sbr.rel (0) target = $region33
  $region32: #{tpu_custom_call.1} parent=0 // pred_region
    _
  $region33: #{tpu_custom_call.1} parent=0 // pred_fallthru
    _
  // Predicated region
  $region34: #{tpu_custom_call.1} parent=0 // pred_check
    _
  $region35: #{tpu_custom_call.1} parent=0 // pred_check_branch
    %31 = sbr.rel (0) target = $region37
  $region36: #{tpu_custom_call.1} parent=0 // pred_region
    _
  $region37: #{tpu_custom_call.1} parent=0 // pred_fallthru
    _
  %v33 = vld [vmem:[%s0] sm:$0xff]
  %v34 = vld [vmem:[%s0 + $0x8] sm:$0xff]
  %v35 = vld [vmem:[%s0 + $0x10] sm:$0xff]
  %v36 = vpack.c.bf16 %v34, %v33
  %v37 = vpack.c.bf16 %v35, %v35
  %v38 = vld [vmem:[%s1] sm:$0xff]
  %v39 = vld [vmem:[%s1 + $0x8] sm:$0xff]
  %v40 = vld [vmem:[%s1 + $0x10] sm:$0xff]
  %v41 = vld [vmem:[%s1 + $0x18] sm:$0xff]
  %v42 = vld [vmem:[%s1 + $0x20] sm:$0xff]
  %v43 = vld [vmem:[%s1 + $0x28] sm:$0xff]
  %v44 = vld [vmem:[%s1 + $0x30] sm:$0xff]
  %v45 = vld [vmem:[%s1 + $0x38] sm:$0xff]
  %v46 = vld [vmem:[%s1 + $0x40] sm:$0xff]
  %v47 = vld [vmem:[%s1 + $0x48] sm:$0xff]
  %v48 = vld [vmem:[%s1 + $0x50] sm:$0xff]
  %v49 = vld [vmem:[%s1 + $0x58] sm:$0xff]
  %v50 = vld [vmem:[%s1 + $0x60] sm:$0xff]
  %v51 = vld [vmem:[%s1 + $0x68] sm:$0xff]
  %v52 = vld [vmem:[%s1 + $0x70] sm:$0xff]
  %v53 = vld [vmem:[%s1 + $0x78] sm:$0xff]
  %v54 = vpack.c.bf16 %v42, %v38
  %v55 = vpack.c.bf16 %v43, %v39
  %v56 = vpack.c.bf16 %v44, %v40
  %v57 = vpack.c.bf16 %v45, %v41
  %v58 = vpack.c.bf16 %v50, %v46
  %v59 = vpack.c.bf16 %v51, %v47
  %v60 = vpack.c.bf16 %v52, %v48
  %v61 = vpack.c.bf16 %v53, %v49
  %v62 = vld [vmem:[%s2] sm:$0xf]
  %v64 = vlaneseq
  %v65 = vshrl.u32 %v64, 7
  %v66 = vsub.s32 0, %v65
  %v67 = vrot.slane %v62, %v66
  %v68 = vlaneseq
  %v69 = vshrl.u32 %v68, 7
  %v70 = vsub.s32 1, %v69
  %v71 = vrot.slane %v62, %v70
  %v72 = vlaneseq
  %v73 = vshrl.u32 %v72, 7
  %v74 = vsub.s32 2, %v73
  %v75 = vrot.slane %v62, %v74
  %v76 = vlaneseq
  %v77 = vshrl.u32 %v76, 7
  %v78 = vsub.s32 3, %v77
  %v79 = vrot.slane %v62, %v78
  %vm84 = vcmask 261120
  %v86 = vsel %vm84, %v36, 0
  %v89 = vsel %vm84, %v37, 0
  %91 = vmatprep.subr.bf16.mxu0 %v55
  %92 = vmatpush1.bf16.msra.mxu0 %v54
  %93 = vmatprep.subr.bf16.mxu0 %v59
  %94 = vmatpush1.bf16.msra.mxu0 %v58
  %95 = vmatprep.subr.bf16.mxu0 0
  %96 = vmatpush1.bf16.msra.mxu0 0
  %97 = vmatprep.subr.bf16.mxu0 0
  %98 = vmatpush1.bf16.msra.mxu0 0
  %99 = vmatprep.subr.bf16.mxu0 0
  %100 = vmatpush1.bf16.msra.mxu0 0
  %101 = vmatprep.subr.bf16.mxu0 0
  %102 = vmatpush1.bf16.msra.mxu0 0
  %103 = vmatprep.subr.bf16.mxu0 0
  %104 = vmatpush1.bf16.msra.mxu0 0
  %105 = vmatprep.subr.bf16.mxu0 0
  %106 = vmatpush1.bf16.msra.mxu0 0
  %107 = vmatprep.subr.bf16.mxu0 0
  %108 = vmatpush1.bf16.msra.mxu0 0
  %109 = vmatprep.subr.bf16.mxu0 0
  %110 = vmatpush1.bf16.msra.mxu0 0
  %111 = vmatprep.subr.bf16.mxu0 0
  %112 = vmatpush1.bf16.msra.mxu0 0
  %113 = vmatprep.subr.bf16.mxu0 0
  %114 = vmatpush1.bf16.msra.mxu0 0
  %115 = vmatprep.subr.bf16.mxu0 0
  %116 = vmatpush1.bf16.msra.mxu0 0
  %117 = vmatprep.subr.bf16.mxu0 0
  %118 = vmatpush1.bf16.msra.mxu0 0
  %119 = vmatprep.subr.bf16.mxu0 0
  %120 = vmatpush1.bf16.msra.mxu0 0
  %121 = vmatprep.subr.bf16.mxu0 0
  %122 = vmatpush1.bf16.msra.mxu0 0
  %123 = vmatprep.mubr.bf16.mxu0 0
  %124 = vmatmul.mubr.bf16.gmra.mrb[0].mxu0 %v86
  %v125 = vpop.f32.mrb[0].mxu0
  %v126 = vadd.f32 %v67, %v125
  %v127 = vpop.f32.mrb[0].mxu0
  %v128 = vadd.f32 %v71, %v127
  %v129 = vpop.f32.mrb[0].mxu0
  %v130 = vadd.f32 %v67, %v129
  %v131 = vpop.f32.mrb[0].mxu0
  %v132 = vadd.f32 %v71, %v131
  %133 = vmatprep.mubr.bf16.mxu0 0
  %134 = vmatmul.mubr.bf16.gmra.mrb[0].mxu0 %v89
  %v135 = vpop.f32.mrb[0].mxu0
  %v136 = vadd.f32 %v67, %v135
  %v137 = vpop.f32.mrb[0].mxu0
  %v138 = vadd.f32 %v71, %v137
  %v139 = vpop.f32.mrb[0].mxu0
  %v140 = vpop.f32.mrb[0].mxu0
  %141 = vdwg.mxu0
  %142 = vmatprep.subr.bf16.mxu0 %v57
  %143 = vmatpush1.bf16.msra.mxu0 %v56
  %144 = vmatprep.subr.bf16.mxu0 %v61
  %145 = vmatpush1.bf16.msra.mxu0 %v60
  %146 = vmatprep.subr.bf16.mxu0 0
  %147 = vmatpush1.bf16.msra.mxu0 0
  %148 = vmatprep.subr.bf16.mxu0 0
  %149 = vmatpush1.bf16.msra.mxu0 0
  %150 = vmatprep.subr.bf16.mxu0 0
  %151 = vmatpush1.bf16.msra.mxu0 0
  %152 = vmatprep.subr.bf16.mxu0 0
  %153 = vmatpush1.bf16.msra.mxu0 0
  %154 = vmatprep.subr.bf16.mxu0 0
  %155 = vmatpush1.bf16.msra.mxu0 0
  %156 = vmatprep.subr.bf16.mxu0 0
  %157 = vmatpush1.bf16.msra.mxu0 0
  %158 = vmatprep.subr.bf16.mxu0 0
  %159 = vmatpush1.bf16.msra.mxu0 0
  %160 = vmatprep.subr.bf16.mxu0 0
  %161 = vmatpush1.bf16.msra.mxu0 0
  %162 = vmatprep.subr.bf16.mxu0 0
  %163 = vmatpush1.bf16.msra.mxu0 0
  %164 = vmatprep.subr.bf16.mxu0 0
  %165 = vmatpush1.bf16.msra.mxu0 0
  %166 = vmatprep.subr.bf16.mxu0 0
  %167 = vmatpush1.bf16.msra.mxu0 0
  %168 = vmatprep.subr.bf16.mxu0 0
  %169 = vmatpush1.bf16.msra.mxu0 0
  %170 = vmatprep.subr.bf16.mxu0 0
  %171 = vmatpush1.bf16.msra.mxu0 0
  %172 = vmatprep.subr.bf16.mxu0 0
  %173 = vmatpush1.bf16.msra.mxu0 0
  %174 = vmatprep.mubr.bf16.mxu0 0
  %175 = vmatmul.mubr.bf16.gmra.mrb[0].mxu0 %v86
  %v176 = vpop.f32.mrb[0].mxu0
  %v177 = vadd.f32 %v75, %v176
  %v178 = vpop.f32.mrb[0].mxu0
  %v179 = vadd.f32 %v79, %v178
  %v180 = vpop.f32.mrb[0].mxu0
  %v181 = vadd.f32 %v75, %v180
  %v182 = vpop.f32.mrb[0].mxu0
  %v183 = vadd.f32 %v79, %v182
  %184 = vmatprep.mubr.bf16.mxu0 0
  %185 = vmatmul.mubr.bf16.gmra.mrb[0].mxu0 %v89
  %v186 = vpop.f32.mrb[0].mxu0
  %v187 = vadd.f32 %v75, %v186
  %v188 = vpop.f32.mrb[0].mxu0
  %v189 = vadd.f32 %v79, %v188
  %v190 = vpop.f32.mrb[0].mxu0
  %v191 = vpop.f32.mrb[0].mxu0
  %192 = vdwg.mxu0
  %v193 = vmax.f32 %v126, 0.0
  %v194 = vmax.f32 %v128, 0.0
  %v195 = vmax.f32 %v177, 0.0
  %v196 = vmax.f32 %v179, 0.0
  %v197 = vmax.f32 %v130, 0.0
  %v198 = vmax.f32 %v132, 0.0
  %v199 = vmax.f32 %v181, 0.0
  %v200 = vmax.f32 %v183, 0.0
  %v201 = vmax.f32 %v136, 0.0
  %v202 = vmax.f32 %v138, 0.0
  %v203 = vmax.f32 %v187, 0.0
  %v204 = vmax.f32 %v189, 0.0
  %v205 = vpack.c.bf16 %v197, %v193
  %v206 = vpack.c.bf16 %v198, %v194
  %v207 = vpack.c.bf16 %v199, %v195
  %v208 = vpack.c.bf16 %v200, %v196
  %v209 = vpack.c.bf16 %v201, %v201
  %v210 = vpack.c.bf16 %v202, %v202
  %v211 = vpack.c.bf16 %v203, %v203
  %v212 = vpack.c.bf16 %v204, %v204
  %v213 = vld [vmem:[%s3] sm:$0xff]
  %v214 = vld [vmem:[%s3 + $0x8] sm:$0xff]
  %v215 = vld [vmem:[%s3 + $0x10] sm:$0xff]
  %v216 = vld [vmem:[%s3 + $0x18] sm:$0xff]
  %v217 = vld [vmem:[%s3 + $0x20] sm:$0xff]
  %v218 = vld [vmem:[%s3 + $0x28] sm:$0xff]
  %v219 = vld [vmem:[%s3 + $0x30] sm:$0xff]
  %v220 = vld [vmem:[%s3 + $0x38] sm:$0xff]
  %v221 = vld [vmem:[%s3 + $0x40] sm:$0xff]
  %v222 = vld [vmem:[%s3 + $0x48] sm:$0xff]
  %v223 = vld [vmem:[%s3 + $0x50] sm:$0xff]
  %v224 = vld [vmem:[%s3 + $0x58] sm:$0xff]
  %v225 = vld [vmem:[%s3 + $0x60] sm:$0xff]
  %v226 = vld [vmem:[%s3 + $0x68] sm:$0xff]
  %v227 = vld [vmem:[%s3 + $0x70] sm:$0xff]
  %v228 = vld [vmem:[%s3 + $0x78] sm:$0xff]
  %v229 = vld [vmem:[%s3 + $0x80] sm:$0xff]
  %v230 = vld [vmem:[%s3 + $0x88] sm:$0xff]
  %v231 = vld [vmem:[%s3 + $0x90] sm:$0xff]
  %v232 = vld [vmem:[%s3 + $0x98] sm:$0xff]
  %v233 = vld [vmem:[%s3 + $0xa0] sm:$0xff]
  %v234 = vld [vmem:[%s3 + $0xa8] sm:$0xff]
  %v235 = vld [vmem:[%s3 + $0xb0] sm:$0xff]
  %v236 = vld [vmem:[%s3 + $0xb8] sm:$0xff]
  %v237 = vld [vmem:[%s3 + $0xc0] sm:$0xff]
  %v238 = vld [vmem:[%s3 + $0xc8] sm:$0xff]
  %v239 = vld [vmem:[%s3 + $0xd0] sm:$0xff]
  %v240 = vld [vmem:[%s3 + $0xd8] sm:$0xff]
  %v241 = vld [vmem:[%s3 + $0xe0] sm:$0xff]
  %v242 = vld [vmem:[%s3 + $0xe8] sm:$0xff]
  %v243 = vld [vmem:[%s3 + $0xf0] sm:$0xff]
  %v244 = vld [vmem:[%s3 + $0xf8] sm:$0xff]
  %v245 = vld [vmem:[%s3 + $0x100] sm:$0xff]
  %v246 = vld [vmem:[%s3 + $0x108] sm:$0xff]
  %v247 = vld [vmem:[%s3 + $0x110] sm:$0xff]
  %v248 = vld [vmem:[%s3 + $0x118] sm:$0xff]
  %v249 = vld [vmem:[%s3 + $0x120] sm:$0xff]
  %v250 = vld [vmem:[%s3 + $0x128] sm:$0xff]
  %v251 = vld [vmem:[%s3 + $0x130] sm:$0xff]
  %v252 = vld [vmem:[%s3 + $0x138] sm:$0xff]
  %v253 = vld [vmem:[%s3 + $0x140] sm:$0xff]
  %v254 = vld [vmem:[%s3 + $0x148] sm:$0xff]
  %v255 = vld [vmem:[%s3 + $0x150] sm:$0xff]
  %v256 = vld [vmem:[%s3 + $0x158] sm:$0xff]
  %v257 = vld [vmem:[%s3 + $0x160] sm:$0xff]
  %v258 = vld [vmem:[%s3 + $0x168] sm:$0xff]
  %v259 = vld [vmem:[%s3 + $0x170] sm:$0xff]
  %v260 = vld [vmem:[%s3 + $0x178] sm:$0xff]
  %v261 = vld [vmem:[%s3 + $0x180] sm:$0xff]
  %v262 = vld [vmem:[%s3 + $0x188] sm:$0xff]
  %v263 = vld [vmem:[%s3 + $0x190] sm:$0xff]
  %v264 = vld [vmem:[%s3 + $0x198] sm:$0xff]
  %v265 = vld [vmem:[%s3 + $0x1a0] sm:$0xff]
  %v266 = vld [vmem:[%s3 + $0x1a8] sm:$0xff]
  %v267 = vld [vmem:[%s3 + $0x1b0] sm:$0xff]
  %v268 = vld [vmem:[%s3 + $0x1b8] sm:$0xff]
  %v269 = vld [vmem:[%s3 + $0x1c0] sm:$0xff]
  %v270 = vld [vmem:[%s3 + $0x1c8] sm:$0xff]
  %v271 = vld [vmem:[%s3 + $0x1d0] sm:$0xff]
  %v272 = vld [vmem:[%s3 + $0x1d8] sm:$0xff]
  %v273 = vld [vmem:[%s3 + $0x1e0] sm:$0xff]
  %v274 = vld [vmem:[%s3 + $0x1e8] sm:$0xff]
  %v275 = vld [vmem:[%s3 + $0x1f0] sm:$0xff]
  %v276 = vld [vmem:[%s3 + $0x1f8] sm:$0xff]
  %v277 = vpack.c.bf16 %v214, %v213
  %v278 = vpack.c.bf16 %v216, %v215
  %v279 = vpack.c.bf16 %v218, %v217
  %v280 = vpack.c.bf16 %v220, %v219
  %v281 = vpack.c.bf16 %v222, %v221
  %v282 = vpack.c.bf16 %v224, %v223
  %v283 = vpack.c.bf16 %v226, %v225
  %v284 = vpack.c.bf16 %v228, %v227
  %v285 = vpack.c.bf16 %v230, %v229
  %v286 = vpack.c.bf16 %v232, %v231
  %v287 = vpack.c.bf16 %v234, %v233
  %v288 = vpack.c.bf16 %v236, %v235
  %v289 = vpack.c.bf16 %v238, %v237
  %v290 = vpack.c.bf16 %v240, %v239
  %v291 = vpack.c.bf16 %v242, %v241
  %v292 = vpack.c.bf16 %v244, %v243
  %v293 = vpack.c.bf16 %v246, %v245
  %v294 = vpack.c.bf16 %v248, %v247
  %v295 = vpack.c.bf16 %v250, %v249
  %v296 = vpack.c.bf16 %v252, %v251
  %v297 = vpack.c.bf16 %v254, %v253
  %v298 = vpack.c.bf16 %v256, %v255
  %v299 = vpack.c.bf16 %v258, %v257
  %v300 = vpack.c.bf16 %v260, %v259
  %v301 = vpack.c.bf16 %v262, %v261
  %v302 = vpack.c.bf16 %v264, %v263
  %v303 = vpack.c.bf16 %v266, %v265
  %v304 = vpack.c.bf16 %v268, %v267
  %v305 = vpack.c.bf16 %v270, %v269
  %v306 = vpack.c.bf16 %v272, %v271
  %v307 = vpack.c.bf16 %v274, %v273
  %v308 = vpack.c.bf16 %v276, %v275
  %v309 = vld [vmem:[%s4] sm:$0x1]
  %v311 = vlaneseq
  %v312 = vshrl.u32 %v311, 7
  %v313 = vsub.s32 0, %v312
  %v314 = vrot.slane %v309, %v313
  %316 = vmatprep.subr.bf16.mxu0 0
  %317 = vmatpush1.bf16.msra.mxu0 %v277
  %318 = vmatprep.subr.bf16.mxu0 0
  %319 = vmatpush1.bf16.msra.mxu0 %v278
  %320 = vmatprep.subr.bf16.mxu0 0
  %321 = vmatpush1.bf16.msra.mxu0 %v279
  %322 = vmatprep.subr.bf16.mxu0 0
  %323 = vmatpush1.bf16.msra.mxu0 %v280
  %324 = vmatprep.subr.bf16.mxu0 0
  %325 = vmatpush1.bf16.msra.mxu0 %v281
  %326 = vmatprep.subr.bf16.mxu0 0
  %327 = vmatpush1.bf16.msra.mxu0 %v282
  %328 = vmatprep.subr.bf16.mxu0 0
  %329 = vmatpush1.bf16.msra.mxu0 %v283
  %330 = vmatprep.subr.bf16.mxu0 0
  %331 = vmatpush1.bf16.msra.mxu0 %v284
  %332 = vmatprep.subr.bf16.mxu0 0
  %333 = vmatpush1.bf16.msra.mxu0 %v285
  %334 = vmatprep.subr.bf16.mxu0 0
  %335 = vmatpush1.bf16.msra.mxu0 %v286
  %336 = vmatprep.subr.bf16.mxu0 0
  %337 = vmatpush1.bf16.msra.mxu0 %v287
  %338 = vmatprep.subr.bf16.mxu0 0
  %339 = vmatpush1.bf16.msra.mxu0 %v288
  %340 = vmatprep.subr.bf16.mxu0 0
  %341 = vmatpush1.bf16.msra.mxu0 %v289
  %342 = vmatprep.subr.bf16.mxu0 0
  %343 = vmatpush1.bf16.msra.mxu0 %v290
  %344 = vmatprep.subr.bf16.mxu0 0
  %345 = vmatpush1.bf16.msra.mxu0 %v291
  %346 = vmatprep.subr.bf16.mxu0 0
  %347 = vmatpush1.bf16.msra.mxu0 %v292
  %348 = vmatprep.mubr.bf16.mxu0 %v206
  %349 = vmatmul.mubr.bf16.gmra.mrb[0].mxu0 %v205
  %v350 = vpop.f32.mrb[0].mxu0
  %v351 = vadd.f32 %v314, %v350
  %v352 = vpop.f32.mrb[0].mxu0
  %v353 = vpop.f32.mrb[0].mxu0
  %v354 = vadd.f32 %v314, %v353
  %v355 = vpop.f32.mrb[0].mxu0
  %356 = vmatprep.mubr.bf16.mxu0 %v210
  %357 = vmatmul.mubr.bf16.gmra.mrb[0].mxu0 %v209
  %v358 = vpop.f32.mrb[0].mxu0
  %v359 = vadd.f32 %v314, %v358
  %v360 = vpop.f32.mrb[0].mxu0
  %v361 = vpop.f32.mrb[0].mxu0
  %v362 = vpop.f32.mrb[0].mxu0
  %363 = vdwg.mxu0
  %364 = vmatprep.subr.bf16.mxu0 0
  %365 = vmatpush1.bf16.msra.mxu0 %v293
  %366 = vmatprep.subr.bf16.mxu0 0
  %367 = vmatpush1.bf16.msra.mxu0 %v294
  %368 = vmatprep.subr.bf16.mxu0 0
  %369 = vmatpush1.bf16.msra.mxu0 %v295
  %370 = vmatprep.subr.bf16.mxu0 0
  %371 = vmatpush1.bf16.msra.mxu0 %v296
  %372 = vmatprep.subr.bf16.mxu0 0
  %373 = vmatpush1.bf16.msra.mxu0 %v297
  %374 = vmatprep.subr.bf16.mxu0 0
  %375 = vmatpush1.bf16.msra.mxu0 %v298
  %376 = vmatprep.subr.bf16.mxu0 0
  %377 = vmatpush1.bf16.msra.mxu0 %v299
  %378 = vmatprep.subr.bf16.mxu0 0
  %379 = vmatpush1.bf16.msra.mxu0 %v300
  %380 = vmatprep.subr.bf16.mxu0 0
  %381 = vmatpush1.bf16.msra.mxu0 %v301
  %382 = vmatprep.subr.bf16.mxu0 0
  %383 = vmatpush1.bf16.msra.mxu0 %v302
  %384 = vmatprep.subr.bf16.mxu0 0
  %385 = vmatpush1.bf16.msra.mxu0 %v303
  %386 = vmatprep.subr.bf16.mxu0 0
  %387 = vmatpush1.bf16.msra.mxu0 %v304
  %388 = vmatprep.subr.bf16.mxu0 0
  %389 = vmatpush1.bf16.msra.mxu0 %v305
  %390 = vmatprep.subr.bf16.mxu0 0
  %391 = vmatpush1.bf16.msra.mxu0 %v306
  %392 = vmatprep.subr.bf16.mxu0 0
  %393 = vmatpush1.bf16.msra.mxu0 %v307
  %394 = vmatprep.subr.bf16.mxu0 0
  %395 = vmatpush1.bf16.msra.mxu0 %v308
  %396 = vmatprep.mubr.bf16.mxu0 %v208
  %397 = vmatmul.mubr.bf16.gmra.mrb[0].mxu0 %v207
  %v398 = vpop.f32.mrb[0].mxu0
  %v399 = vadd.f32 %v351, %v398
  %v400 = vpop.f32.mrb[0].mxu0
  %v401 = vpop.f32.mrb[0].mxu0
  %v402 = vadd.f32 %v354, %v401
  %v403 = vpop.f32.mrb[0].mxu0
  %404 = vmatprep.mubr.bf16.mxu0 %v212
  %405 = vmatmul.mubr.bf16.gmra.mrb[0].mxu0 %v211
  %v406 = vpop.f32.mrb[0].mxu0
  %v407 = vadd.f32 %v359, %v406
  %v408 = vpop.f32.mrb[0].mxu0
  %v409 = vpop.f32.mrb[0].mxu0
  %v410 = vpop.f32.mrb[0].mxu0
  %411 = vdwg.mxu0
  %v412 = vmax.f32 %v399, 0.0
  %v413 = vmax.f32 %v402, 0.0
  %v414 = vmax.f32 %v407, 0.0
  %v415 = vpack.c.bf16 %v413, %v412
  %v416 = vpack.c.bf16 %v414, %v414
  %v417 = vld [vmem:[%s5] sm:$0xff]
  %v418 = vld [vmem:[%s5 + $0x8] sm:$0xff]
  %v419 = vld [vmem:[%s5 + $0x10] sm:$0xff]
  %v420 = vld [vmem:[%s5 + $0x18] sm:$0xff]
  %v421 = vld [vmem:[%s5 + $0x20] sm:$0xff]
  %v422 = vld [vmem:[%s5 + $0x28] sm:$0xff]
  %v423 = vld [vmem:[%s5 + $0x30] sm:$0xff]
  %v424 = vld [vmem:[%s5 + $0x38] sm:$0xff]
  %v425 = vpack.c.bf16 %v418, %v417
  %v426 = vpack.c.bf16 %v420, %v419
  %v427 = vpack.c.bf16 %v422, %v421
  %v428 = vpack.c.bf16 %v424, %v423
  %v429 = vld [vmem:[%s6] sm:$0x1]
  %v431 = vlaneseq
  %v432 = vshrl.u32 %v431, 7
  %v433 = vsub.s32 0, %v432
  %v434 = vrot.slane %v429, %v433
  %vm436 = vcmask 523264
  %v438 = vsel %vm436, %v415, 0
  %v441 = vsel %vm436, %v416, 0
  %443 = vmatprep.subr.bf16.mxu0 0
  %444 = vmatpush1.bf16.msra.mxu0 %v425
  %445 = vmatprep.subr.bf16.mxu0 0
  %446 = vmatpush1.bf16.msra.mxu0 %v426
  %447 = vmatprep.subr.bf16.mxu0 0
  %448 = vmatpush1.bf16.msra.mxu0 %v427
  %449 = vmatprep.subr.bf16.mxu0 0
  %450 = vmatpush1.bf16.msra.mxu0 %v428
  %451 = vmatprep.subr.bf16.mxu0 0
  %452 = vmatpush1.bf16.msra.mxu0 0
  %453 = vmatprep.subr.bf16.mxu0 0
  %454 = vmatpush1.bf16.msra.mxu0 0
  %455 = vmatprep.subr.bf16.mxu0 0
  %456 = vmatpush1.bf16.msra.mxu0 0
  %457 = vmatprep.subr.bf16.mxu0 0
  %458 = vmatpush1.bf16.msra.mxu0 0
  %459 = vmatprep.subr.bf16.mxu0 0
  %460 = vmatpush1.bf16.msra.mxu0 0
  %461 = vmatprep.subr.bf16.mxu0 0
  %462 = vmatpush1.bf16.msra.mxu0 0
  %463 = vmatprep.subr.bf16.mxu0 0
  %464 = vmatpush1.bf16.msra.mxu0 0
  %465 = vmatprep.subr.bf16.mxu0 0
  %466 = vmatpush1.bf16.msra.mxu0 0
  %467 = vmatprep.subr.bf16.mxu0 0
  %468 = vmatpush1.bf16.msra.mxu0 0
  %469 = vmatprep.subr.bf16.mxu0 0
  %470 = vmatpush1.bf16.msra.mxu0 0
  %471 = vmatprep.subr.bf16.mxu0 0
  %472 = vmatpush1.bf16.msra.mxu0 0
  %473 = vmatprep.subr.bf16.mxu0 0
  %474 = vmatpush1.bf16.msra.mxu0 0
  %475 = vmatprep.mubr.bf16.mxu0 0
  %476 = vmatmul.mubr.bf16.gmra.mrb[0].mxu0 %v438
  %v477 = vpop.f32.mrb[0].mxu0
  %v478 = vadd.f32 %v434, %v477
  %v479 = vpop.f32.mrb[0].mxu0
  %v480 = vpop.f32.mrb[0].mxu0
  %v481 = vadd.f32 %v434, %v480
  %v482 = vpop.f32.mrb[0].mxu0
  %483 = vmatprep.mubr.bf16.mxu0 0
  %484 = vmatmul.mubr.bf16.gmra.mrb[0].mxu0 %v441
  %v485 = vpop.f32.mrb[0].mxu0
  %v486 = vadd.f32 %v434, %v485
  %v487 = vpop.f32.mrb[0].mxu0
  %v488 = vpop.f32.mrb[0].mxu0
  %v489 = vpop.f32.mrb[0].mxu0
  %490 = vdwg.mxu0
  %v491 = vmax.f32 %v478, 0.0
  %v492 = vmax.f32 %v481, 0.0
  %v493 = vmax.f32 %v486, 0.0
  %v494 = vpack.c.bf16 %v492, %v491
  %v495 = vpack.c.bf16 %v493, %v493
  %v496 = vld [vmem:[%s7] sm:$0xff]
  %v497 = vld [vmem:[%s7 + $0x8] sm:$0xff]
  %v498 = vpack.c.bf16 %v497, %v496
  %v499 = vld [vmem:[%s8] sm:$0x1]
  %v501 = vlaneseq
  %v502 = vshrl.u32 %v501, 7
  %v503 = vsub.s32 0, %v502
  %v504 = vrot.slane %v499, %v503
  %vm506 = vcmask 130048
  %v508 = vsel %vm506, %v494, 0
  %v511 = vsel %vm506, %v495, 0
  %513 = vmatprep.subr.bf16.mxu0 0
  %514 = vmatpush1.bf16.msra.mxu0 %v498
  %515 = vmatprep.subr.bf16.mxu0 0
  %516 = vmatpush1.bf16.msra.mxu0 0
  %517 = vmatprep.subr.bf16.mxu0 0
  %518 = vmatpush1.bf16.msra.mxu0 0
  %519 = vmatprep.subr.bf16.mxu0 0
  %520 = vmatpush1.bf16.msra.mxu0 0
  %521 = vmatprep.subr.bf16.mxu0 0
  %522 = vmatpush1.bf16.msra.mxu0 0
  %523 = vmatprep.subr.bf16.mxu0 0
  %524 = vmatpush1.bf16.msra.mxu0 0
  %525 = vmatprep.subr.bf16.mxu0 0
  %526 = vmatpush1.bf16.msra.mxu0 0
  %527 = vmatprep.subr.bf16.mxu0 0
  %528 = vmatpush1.bf16.msra.mxu0 0
  %529 = vmatprep.subr.bf16.mxu0 0
  %530 = vmatpush1.bf16.msra.mxu0 0
  %531 = vmatprep.subr.bf16.mxu0 0
  %532 = vmatpush1.bf16.msra.mxu0 0
  %533 = vmatprep.subr.bf16.mxu0 0
  %534 = vmatpush1.bf16.msra.mxu0 0
  %535 = vmatprep.subr.bf16.mxu0 0
  %536 = vmatpush1.bf16.msra.mxu0 0
  %537 = vmatprep.subr.bf16.mxu0 0
  %538 = vmatpush1.bf16.msra.mxu0 0
  %539 = vmatprep.subr.bf16.mxu0 0
  %540 = vmatpush1.bf16.msra.mxu0 0
  %541 = vmatprep.subr.bf16.mxu0 0
  %542 = vmatpush1.bf16.msra.mxu0 0
  %543 = vmatprep.subr.bf16.mxu0 0
  %544 = vmatpush1.bf16.msra.mxu0 0
  %545 = vmatprep.mubr.bf16.mxu0 0
  %546 = vmatmul.mubr.bf16.gmra.mrb[0].mxu0 %v508
  %v547 = vpop.f32.mrb[0].mxu0
  %v548 = vadd.f32 %v504, %v547
  %v549 = vpop.f32.mrb[0].mxu0
  %v550 = vpop.f32.mrb[0].mxu0
  %v551 = vadd.f32 %v504, %v550
  %v552 = vpop.f32.mrb[0].mxu0
  %553 = vmatprep.mubr.bf16.mxu0 0
  %554 = vmatmul.mubr.bf16.gmra.mrb[0].mxu0 %v511
  %v555 = vpop.f32.mrb[0].mxu0
  %v556 = vadd.f32 %v504, %v555
  %v557 = vpop.f32.mrb[0].mxu0
  %v558 = vpop.f32.mrb[0].mxu0
  %v559 = vpop.f32.mrb[0].mxu0
  %560 = vdwg.mxu0
  %vm561 = vcmask 64512
  %562 = vst.msk [vmem:[%s9] sm:$0xff] %vm561, %v548
  %563 = vst.msk [vmem:[%s9 + $0x8] sm:$0xff] %vm561, %v551
  %564 = vst.msk [vmem:[%s9 + $0x10] sm:$0xff] %vm561, %v556
  // Predicated region
  $region38: #{tpu_custom_call.1} parent=0 // pred_check
    _
  $region39: #{tpu_custom_call.1} parent=0 // pred_check_branch
    %566 = sbr.rel (0) target = $region41
  $region40: #{tpu_custom_call.1} parent=0 // pred_region
    _
  $region41: #{tpu_custom_call.1} parent=0 // pred_fallthru
    _
  // Predicated region
  $region42: #{tpu_custom_call.1} parent=0 // pred_check
    _
  $region43: #{tpu_custom_call.1} parent=0 // pred_check_branch
    %568 = sbr.rel (0) target = $region45
  $region44: #{tpu_custom_call.1} parent=0 // pred_region
    _
  $region45: #{tpu_custom_call.1} parent=0 // pred_fallthru
    _

</llo_original>
